<compile_context>
chip_gen: v5e
topology: v5e:2x2
jax: 0.10.0
libtpu: 0.0.40
codegen_flags: <defaults>
</compile_context>

<pallas_src>
import functools

import jax
import jax.numpy as jnp
from jax.experimental import pallas as pl
from jax.experimental.pallas import tpu as pltpu


LANE = 128        # TPU lane width: feature dims padded to this
MAX_TILE_B = 512  # rows per batch tile (measured sweet spot for mem-bound tiles)


def _round_up(x, m):
    return ((x + m - 1) // m) * m


def _silu(x):
    return x * jax.nn.sigmoid(x)


# --------------------- one-time parameter preparation ------------------------

def prepare_params(params, mxu_dtype=jnp.float32):
    """Pad [(W [in,out], b [out])...] to lane-aligned shapes ONCE.

    Hoisted out of the per-call hot path.  Weights may be stored as bf16
    (mxu_dtype=jnp.bfloat16) to halve weight DMA / VMEM on v6e/v7x; biases and
    all non-MXU math stay f32.  Returns a flat tuple (w0, b0, w1, b1, ...).
    """
    flat = []
    for (w, b) in params:
        fi, fo = w.shape
        fi_p, fo_p = _round_up(fi, LANE), _round_up(fo, LANE)
        w_p = (jnp.zeros((fi_p, fo_p), jnp.float32)
               .at[:fi, :fo].set(w.astype(jnp.float32))
               .astype(mxu_dtype))
        b_p = (jnp.zeros((1, fo_p), jnp.float32)
               .at[:, :fo].set(jnp.reshape(b, (1, -1)).astype(jnp.float32)))
        flat.append(w_p)
        flat.append(b_p)
    return tuple(flat)


# ------------------------------- kernels -------------------------------------

def _apply_net(ws, bs, h):
    """Padded MLP: (Linear+SiLU) x (L-1), Linear+Tanh.  h is f32, acc is f32."""
    num_linear = len(ws)
    for layer in range(num_linear):
        w, b = ws[layer], bs[layer]
        lhs = h.astype(w.dtype) if w.dtype != jnp.float32 else h
        h = jnp.dot(lhs, w, preferred_element_type=jnp.float32) + b
        h = _silu(h) if layer < num_linear - 1 else jnp.tanh(h)
    return h


def _ode_fwd_kernel(num_linear, *refs):
    # refs = [z_ref, w0, b0, ..., w_{L-1}, b_{L-1}, out_ref]
    z_ref, out_ref = refs[0], refs[-1]
    param_refs = refs[1:-1]
    ws = [param_refs[2 * l][...] for l in range(num_linear)]
    bs = [param_refs[2 * l + 1][...] for l in range(num_linear)]
    z = z_ref[...].astype(jnp.float32)
    out_ref[...] = (z + _apply_net(ws, bs, z)).astype(out_ref.dtype)


def _ode_euler_kernel(num_linear, n_steps, dt, *refs):
    # Fused explicit-Euler rollout of dz/dt = z + net(z):
    #   z_{k+1} = z_k + dt * (z_k + net(z_k))
    # Weights are loaded from VMEM once and stay resident across all steps.
    z_ref, out_ref = refs[0], refs[-1]
    param_refs = refs[1:-1]
    ws = [param_refs[2 * l][...] for l in range(num_linear)]
    bs = [param_refs[2 * l + 1][...] for l in range(num_linear)]

    def step(_, z):
        return z + dt * (z + _apply_net(ws, bs, z))

    z0 = z_ref[...].astype(jnp.float32)
    zf = jax.lax.fori_loop(0, n_steps, step, z0)
    out_ref[...] = zf.astype(out_ref.dtype)


# ------------------------------ launch helper --------------------------------

def _launch(kernel_body, z, flat_params, latent_dim, tile_b):
    """Pad z (if needed), run the tiled pallas_call, slice back.  Called inside
    jit so pad/slice stay in the same XLA region as the kernel."""
    B = z.shape[0]
    latent_p = flat_params[0].shape[0]
    B_p = _round_up(B, tile_b)

    zf = z.astype(jnp.float32)
    needs_pad = (B_p != B) or (latent_p != latent_dim)
    if needs_pad:
        z_p = jnp.zeros((B_p, latent_p), jnp.float32).at[:B, :latent_dim].set(zf)
    else:
        z_p = zf

    grid = (B_p // tile_b,)
    in_specs = [pl.BlockSpec((tile_b, latent_p), lambda i: (i, 0))]
    # Grid-invariant weights/biases: constant index_map -> DMA'd once,
    # VMEM-resident across all grid iterations.
    # TODO(synk): for large hidden dims on v7x (64 MiB VMEM) add
    #             pipeline_mode=pl.Buffered(1) on these specs and set
    #             pltpu.CompilerParams(vmem_limit_bytes=...).
    for p in flat_params:
        in_specs.append(pl.BlockSpec(p.shape, lambda i: (0, 0)))

    out_p = pl.pallas_call(
        kernel_body,
        out_shape=jax.ShapeDtypeStruct((B_p, latent_p), z.dtype),
        grid=grid,
        in_specs=in_specs,
        out_specs=pl.BlockSpec((tile_b, latent_p), lambda i: (i, 0)),
        compiler_params=pltpu.CompilerParams(
            dimension_semantics=("parallel",)),
    )(z_p, *flat_params)

    return out_p[:B, :latent_dim] if needs_pad else out_p


@functools.partial(jax.jit, static_argnames=("latent_dim", "tile_b"))
def _ode_forward_jit(z, flat_params, *, latent_dim, tile_b):
    num_linear = len(flat_params) // 2
    kernel = functools.partial(_ode_fwd_kernel, num_linear)
    return _launch(kernel, z, flat_params, latent_dim, tile_b)


@functools.partial(jax.jit,
                   static_argnames=("latent_dim", "tile_b", "n_steps", "dt"))
def _ode_euler_jit(z, flat_params, *, latent_dim, tile_b, n_steps, dt):
    num_linear = len(flat_params) // 2
    kernel = functools.partial(_ode_euler_kernel, num_linear, n_steps, dt)
    return _launch(kernel, z, flat_params, latent_dim, tile_b)


# ------------------------------ public API -----------------------------------

def _validate_tile_b(tile_b):
    if tile_b < 8 or tile_b % 8 != 0:
        raise ValueError(f"tile_b must be a positive multiple of 8, got {tile_b}")
    return tile_b


def _auto_tile_b(B):
    B8 = max(8, _round_up(B, 8))
    if B8 <= 8:
        return 8
    # Aim for >=2 grid steps (keeps both v7x TensorCores busy) but cap the tile
    # at MAX_TILE_B rows (amortizes per-step overhead, trivially fits VMEM).
    half = _round_up((B8 + 1) // 2, 8)
    return max(8, min(MAX_TILE_B, half))


def ode_forward(z, flat_params, latent_dim, *, tile_b=None):
    """forward(t, z) = z + net(z).  flat_params must come from prepare_params()."""
    tile_b = _auto_tile_b(z.shape[0]) if tile_b is None else _validate_tile_b(tile_b)
    return _ode_forward_jit(z, flat_params, latent_dim=latent_dim, tile_b=tile_b)


def ode_integrate_euler(z, flat_params, latent_dim, *, n_steps, dt, tile_b=None):
    """Fused explicit-Euler rollout of dz/dt = forward(t, z) = z + net(z).

    Launch + weight DMA happen once per trajectory instead of once per step.
    TODO(synk): match the exact odeint scheme (RK4/dopri) used by the training loop.
    """
    tile_b = _auto_tile_b(z.shape[0]) if tile_b is None else _validate_tile_b(tile_b)
    return _ode_euler_jit(z, flat_params, latent_dim=latent_dim, tile_b=tile_b,
                          n_steps=int(n_steps), dt=float(dt))


# ------------------------------ test harness ---------------------------------

def _init_linear(key, fan_in, fan_out):
    # Deterministic synthetic init (PyTorch-style uniform +-1/sqrt(fan_in)).
    kw, kb = jax.random.split(key)
    bound = 1.0 / jnp.sqrt(fan_in)
    w = jax.random.uniform(kw, (fan_in, fan_out), jnp.float32, -bound, bound)
    b = jax.random.uniform(kb, (1, fan_out), jnp.float32, -bound, bound)
    return w, b


def _reference_forward(z, params):
    h = z
    n = len(params)
    for i, (w, b) in enumerate(params):
        h = h @ w + jnp.reshape(b, (1, -1))
        h = _silu(h) if i < n - 1 else jnp.tanh(h)
    return z + h


def _reference_euler(z, params, n_steps, dt):
    for _ in range(n_steps):
        z = z + dt * _reference_forward(z, params)
    return z


if __name__ == "__main__":
    # Small config consistent with the module's __init__:
    latent_dim = 8
    num_hidden = 32
    num_layers = 2      # -> Linear(8,32)+SiLU, Linear(32,32)+SiLU, Linear(32,8)+Tanh
    batch = 10          # non-multiple of 8: exercises pad + slice + 2-step grid

    key = jax.random.PRNGKey(0)
    keys = jax.random.split(key, num_layers + 2)

    params = [_init_linear(keys[0], latent_dim, num_hidden)]
    for i in range(num_layers - 1):
        params.append(_init_linear(keys[1 + i], num_hidden, num_hidden))
    params.append(_init_linear(keys[num_layers], num_hidden, latent_dim))

    # One-time lane padding (hoisted out of the per-call hot path).
    flat_params = jax.block_until_ready(prepare_params(params, mxu_dtype=jnp.float32))

    z = jax.random.normal(keys[-1], (batch, latent_dim), jnp.float32)
    t = jnp.zeros(())   # unused, mirrors the odeint wrapper signature

    # Single forward(t, z) = z + net(z).
    out = jax.block_until_ready(ode_forward(z, flat_params, latent_dim))
    ref = _reference_forward(z, params)
    assert out.shape == (batch, latent_dim)
    assert jnp.allclose(out, ref, atol=1e-5, rtol=1e-5), "forward mismatch vs reference"

    # Fused Euler rollout: time loop inside the kernel, weights resident.
    n_steps, dt = 8, 0.05
    traj = jax.block_until_ready(
        ode_integrate_euler(z, flat_params, latent_dim, n_steps=n_steps, dt=dt))
    ref_traj = _reference_euler(z, params, n_steps, dt)
    assert traj.shape == (batch, latent_dim)
    assert jnp.allclose(traj, ref_traj, atol=1e-4, rtol=1e-4), "euler mismatch vs reference"

    print("KERNEL_OK")
</pallas_src>

<mosaic_0001>
module attributes {stable_mosaic.version = 11 : i64} {
  func.func @_ode_fwd_kernel(%arg0: i32, %arg1: memref<8x128xf32, #tpu.memory_space<vmem>>, %arg2: memref<128x128xf32, #tpu.memory_space<vmem>>, %arg3: memref<1x128xf32, #tpu.memory_space<vmem>>, %arg4: memref<128x128xf32, #tpu.memory_space<vmem>>, %arg5: memref<1x128xf32, #tpu.memory_space<vmem>>, %arg6: memref<128x128xf32, #tpu.memory_space<vmem>>, %arg7: memref<1x128xf32, #tpu.memory_space<vmem>>, %arg8: memref<8x128xf32, #tpu.memory_space<vmem>>) attributes {dimension_semantics = [#tpu.dimension_semantics<parallel>], iteration_bounds = array<i64: 2>, scalar_prefetch = 0 : i64, scratch_operands = 0 : i64, tpu.core_type = #tpu.core_type<tc>, window_params = [{transform_indices = @transform_0, window_bounds = array<i64: 8, 128>}, {pipeline_mode = #tpu.pipeline_mode<synchronous>, transform_indices = @transform_1, window_bounds = array<i64: 128, 128>}, {pipeline_mode = #tpu.pipeline_mode<synchronous>, transform_indices = @transform_2, window_bounds = array<i64: 1, 128>}, {pipeline_mode = #tpu.pipeline_mode<synchronous>, transform_indices = @transform_3, window_bounds = array<i64: 128, 128>}, {pipeline_mode = #tpu.pipeline_mode<synchronous>, transform_indices = @transform_4, window_bounds = array<i64: 1, 128>}, {pipeline_mode = #tpu.pipeline_mode<synchronous>, transform_indices = @transform_5, window_bounds = array<i64: 128, 128>}, {pipeline_mode = #tpu.pipeline_mode<synchronous>, transform_indices = @transform_6, window_bounds = array<i64: 1, 128>}, {transform_indices = @transform_7, window_bounds = array<i64: 8, 128>}]} {
    %c0 = arith.constant 0 : index
    %c0_0 = arith.constant 0 : index
    %0 = vector.load %arg2[%c0, %c0_0] : memref<128x128xf32, #tpu.memory_space<vmem>>, vector<128x128xf32>
    %c0_1 = arith.constant 0 : index
    %c0_2 = arith.constant 0 : index
    %1 = vector.load %arg4[%c0_1, %c0_2] : memref<128x128xf32, #tpu.memory_space<vmem>>, vector<128x128xf32>
    %c0_3 = arith.constant 0 : index
    %c0_4 = arith.constant 0 : index
    %2 = vector.load %arg6[%c0_3, %c0_4] : memref<128x128xf32, #tpu.memory_space<vmem>>, vector<128x128xf32>
    %c0_5 = arith.constant 0 : index
    %c0_6 = arith.constant 0 : index
    %3 = vector.load %arg3[%c0_5, %c0_6] : memref<1x128xf32, #tpu.memory_space<vmem>>, vector<1x128xf32>
    %c0_7 = arith.constant 0 : index
    %c0_8 = arith.constant 0 : index
    %4 = vector.load %arg5[%c0_7, %c0_8] : memref<1x128xf32, #tpu.memory_space<vmem>>, vector<1x128xf32>
    %c0_9 = arith.constant 0 : index
    %c0_10 = arith.constant 0 : index
    %5 = vector.load %arg7[%c0_9, %c0_10] : memref<1x128xf32, #tpu.memory_space<vmem>>, vector<1x128xf32>
    %c0_11 = arith.constant 0 : index
    %c0_12 = arith.constant 0 : index
    %6 = vector.load %arg1[%c0_11, %c0_12] : memref<8x128xf32, #tpu.memory_space<vmem>>, vector<8x128xf32>
    %cst = arith.constant dense<0.000000e+00> : vector<8x128xf32>
    %7 = tpu.matmul %6, %0, %cst {dimension_numbers = #tpu.dot_dimension_numbers<[1], [0], [0], [1], [0, 0, 1, 1], [], []>} : vector<8x128xf32>, vector<128x128xf32>, vector<8x128xf32> -> vector<8x128xf32>
    %8 = vector.broadcast %3 : vector<1x128xf32> to vector<8x128xf32>
    %9 = arith.addf %7, %8 : vector<8x128xf32>
    %10 = arith.negf %9 : vector<8x128xf32>
    %11 = math.exp %10 : vector<8x128xf32>
    %cst_13 = arith.constant 1.000000e+00 : f32
    %12 = vector.broadcast %cst_13 : f32 to vector<8x128xf32>
    %13 = arith.addf %12, %11 : vector<8x128xf32>
    %14 = arith.divf %12, %13 : vector<8x128xf32>
    %15 = arith.mulf %9, %14 : vector<8x128xf32>
    %cst_14 = arith.constant dense<0.000000e+00> : vector<8x128xf32>
    %16 = tpu.matmul %15, %1, %cst_14 {dimension_numbers = #tpu.dot_dimension_numbers<[1], [0], [0], [1], [0, 0, 1, 1], [], []>} : vector<8x128xf32>, vector<128x128xf32>, vector<8x128xf32> -> vector<8x128xf32>
    %17 = vector.broadcast %4 : vector<1x128xf32> to vector<8x128xf32>
    %18 = arith.addf %16, %17 : vector<8x128xf32>
    %19 = arith.negf %18 : vector<8x128xf32>
    %20 = math.exp %19 : vector<8x128xf32>
    %cst_15 = arith.constant 1.000000e+00 : f32
    %21 = vector.broadcast %cst_15 : f32 to vector<8x128xf32>
    %22 = arith.addf %21, %20 : vector<8x128xf32>
    %23 = arith.divf %21, %22 : vector<8x128xf32>
    %24 = arith.mulf %18, %23 : vector<8x128xf32>
    %cst_16 = arith.constant dense<0.000000e+00> : vector<8x128xf32>
    %25 = tpu.matmul %24, %2, %cst_16 {dimension_numbers = #tpu.dot_dimension_numbers<[1], [0], [0], [1], [0, 0, 1, 1], [], []>} : vector<8x128xf32>, vector<128x128xf32>, vector<8x128xf32> -> vector<8x128xf32>
    %26 = vector.broadcast %5 : vector<1x128xf32> to vector<8x128xf32>
    %27 = arith.addf %25, %26 : vector<8x128xf32>
    %28 = math.tanh %27 : vector<8x128xf32>
    %29 = arith.addf %6, %28 : vector<8x128xf32>
    %c0_17 = arith.constant 0 : index
    %c0_18 = arith.constant 0 : index
    %30 = vector.load %arg8[%c0_17, %c0_18] : memref<8x128xf32, #tpu.memory_space<vmem>>, vector<8x128xf32>
    tpu.vector_store %arg8[%c0_17, %c0_18], %29 {strides = array<i32>} : memref<8x128xf32, #tpu.memory_space<vmem>>, vector<8x128xf32>,
    return
  }
  func.func @transform_0(%arg0: i32) -> (i32, i32) {
    %c0_i32 = arith.constant 0 : i32
    %c0_i32_0 = arith.constant 0 : i32
    return %arg0, %c0_i32 : i32, i32
  }
  func.func @transform_1(%arg0: i32) -> (i32, i32) {
    %c0_i32 = arith.constant 0 : i32
    %c0_i32_0 = arith.constant 0 : i32
    %c0_i32_1 = arith.constant 0 : i32
    return %c0_i32, %c0_i32_0 : i32, i32
  }
  func.func @transform_2(%arg0: i32) -> (i32, i32) {
    %c0_i32 = arith.constant 0 : i32
    %c0_i32_0 = arith.constant 0 : i32
    %c0_i32_1 = arith.constant 0 : i32
    return %c0_i32, %c0_i32_0 : i32, i32
  }
  func.func @transform_3(%arg0: i32) -> (i32, i32) {
    %c0_i32 = arith.constant 0 : i32
    %c0_i32_0 = arith.constant 0 : i32
    %c0_i32_1 = arith.constant 0 : i32
    return %c0_i32, %c0_i32_0 : i32, i32
  }
  func.func @transform_4(%arg0: i32) -> (i32, i32) {
    %c0_i32 = arith.constant 0 : i32
    %c0_i32_0 = arith.constant 0 : i32
    %c0_i32_1 = arith.constant 0 : i32
    return %c0_i32, %c0_i32_0 : i32, i32
  }
  func.func @transform_5(%arg0: i32) -> (i32, i32) {
    %c0_i32 = arith.constant 0 : i32
    %c0_i32_0 = arith.constant 0 : i32
    %c0_i32_1 = arith.constant 0 : i32
    return %c0_i32, %c0_i32_0 : i32, i32
  }
  func.func @transform_6(%arg0: i32) -> (i32, i32) {
    %c0_i32 = arith.constant 0 : i32
    %c0_i32_0 = arith.constant 0 : i32
    %c0_i32_1 = arith.constant 0 : i32
    return %c0_i32, %c0_i32_0 : i32, i32
  }
  func.func @transform_7(%arg0: i32) -> (i32, i32) {
    %c0_i32 = arith.constant 0 : i32
    %c0_i32_0 = arith.constant 0 : i32
    return %arg0, %c0_i32 : i32, i32
  }
}

</mosaic_0001>

<llo_original>
// kernel: _ode_forward_jit.1
$region0: #{_ode_forward_jit.1}
  #allocation0 [shape = 'u32[]', space=smem, size = 0x4, offset = 0x4, fixed_abs, tag = 'smem constant byte address 0x4 - core index']
  #allocation1 [shape = 'u32[72,128]{1,0:T(1,128)}', space=vmem, size = 0x9000, scoped, tag = 'internal scratch']
  %s0 = inlined_call_operand.vmem [shape: f32[16,128], index: 0, kind: input, shape index: {}]
  %s1 = inlined_call_operand.hbm [shape: f32[128,128], index: 1, kind: input, shape index: {}]
  %s2 = inlined_call_operand.vmem [shape: f32[1,128], index: 2, kind: input, shape index: {}]
  %s3 = inlined_call_operand.hbm [shape: f32[128,128], index: 3, kind: input, shape index: {}]
  %s4 = inlined_call_operand.vmem [shape: f32[1,128], index: 4, kind: input, shape index: {}]
  %s5 = inlined_call_operand.hbm [shape: f32[128,128], index: 5, kind: input, shape index: {}]
  %s6 = inlined_call_operand.vmem [shape: f32[1,128], index: 6, kind: input, shape index: {}]
  %s7 = inlined_call_operand.vmem [shape: f32[16,128], index: 7, kind: output, shape index: {}]
  %s8 = sld [smem:[#allocation0]]
  $region73: #{_ode_forward_jit.1} parent=0
    _
  %s10 = ssub.s32 1, %s8
  %s11 = scalar_select 0, %s10, %s8
  $region1: #{_ode_forward_jit.1} parent=0
    #allocation2 [shape = 'u8[65536]{0}', space=vmem, size = 0x10000, scoped, tag = 'input window, operand 1, single buffered']
    #allocation3 [shape = 's32[2]{0}', space=sflag, size = 0x8, scoped, tag = 'scoped memory for _ode_forward_jit.1']
    #allocation4 [shape = 'u8[65536]{0}', space=vmem, size = 0x10000, scoped, tag = 'input window, operand 3, single buffered']
    #allocation5 [shape = 's32[1]{0}', space=sflag, size = 0x4, scoped, tag = 'scoped memory for _ode_forward_jit.1']
    #allocation6 [shape = 'u8[65536]{0}', space=vmem, size = 0x10000, scoped, tag = 'input window, operand 5, single buffered']
    %12 = vsyncpa [#allocation3], 0
    %13 = vsyncpa [#allocation5], 0
    loop: start=0, step=1, limit=4
    $region2: #{_ode_forward_jit.1} parent=1 // loop_pre_header
      _
    $region3: #{_ode_forward_jit.1} parent=1 // loop_header
      %s15 = sphi 0, %s19
      %p16 = scmp.ge.s32.totalorder %s15, 4
      %s25 = sphi 0, %s27
      %s28 = sphi 0, %s25
      %s29 = sphi 0, %s28
      %s45 = sphi 0, %s29
      %s49 = sphi 0, %s49
      %s51 = sphi 0, %s49
      %s52 = sphi 0, %s51
      %s66 = sphi 0, %s52
      %s70 = sphi 0, %s70
      %s72 = sphi 0, %s70
      %s73 = sphi 0, %s72
      %s87 = sphi 0, %s73
      %s91 = sphi 0, %s91
      %s93 = sphi 0, %s91
      %s94 = sphi 0, %s93
      %s108 = sphi 0, %s94
      %s112 = sphi 0, %s112
      %s114 = sphi 0, %s112
      %s115 = sphi 0, %s114
      %s129 = sphi 0, %s115
      %s133 = sphi 0, %s133
      %s135 = sphi 0, %s133
      %s136 = sphi 0, %s135
      %s150 = sphi 0, %s136
      %s154 = sphi 0, %s154
      %s156 = sphi 0, %s154
      %s157 = sphi 0, %s156
      %s171 = sphi 0, %s157
      %s177 = sphi 0, %s179
      %s180 = sphi 0, %s177
      %s181 = sphi 0, %s180
      %s197 = sphi 0, %s181
    $region4: #{_ode_forward_jit.1} parent=1 // loop_header_branch
      %18 = sbr.rel (%p16) target = $region8
    $region5: #{_ode_forward_jit.1} parent=1 // loop_body
      %s20 = ssub.s32 %s15, 1
      %s21 = ssub.s32 %s15, 2
      %s22 = sadd.s32 %s15, 1
      %s23 = ssub.s32 %s15, %s22
      %p24 = scmp.eq.s32.totalorder %s23, 0
      %s26 = sadd.s32 %s25, 1
      %s27 = scalar_select %p24, %s25, %s26
      %p30 = pneg %p24
      %p31 = scmp.eq.s32.totalorder %s15, 1
      %p32 = por %p30, %p31
      %p33 = scmp.ne.s32.totalorder %s25, %s28
      %p34 = scmp.eq.s32.totalorder %s15, 0
      %p35 = por %p33, %p34
      %p36 = scmp.ne.s32.totalorder %s25, %s28
      %p37 = scmp.eq.s32.totalorder %s20, 1
      %p38 = por %p36, %p37
      %p39 = scmp.ne.s32.totalorder %s28, %s29
      %p40 = scmp.eq.s32.totalorder %s20, 0
      %p41 = por %p39, %p40
      %p42 = scmp.ne.s32.totalorder %s28, %s29
      %p43 = scmp.eq.s32.totalorder %s21, 1
      %p44 = por %p42, %p43
      %p46 = scmp.ne.s32.totalorder %s29, %s45
      %p47 = scmp.eq.s32.totalorder %s21, 0
      %p48 = por %p46, %p47
      %s50 = sadd.s32 %s49, 1
      %p53 = scmp.eq.s32.totalorder %s15, 1
      %p54 = scmp.ne.s32.totalorder %s49, %s51
      %p55 = scmp.eq.s32.totalorder %s15, 0
      %p56 = por %p54, %p55
      %p57 = scmp.ne.s32.totalorder %s49, %s51
      %p58 = scmp.eq.s32.totalorder %s20, 1
      %p59 = por %p57, %p58
      %p60 = scmp.ne.s32.totalorder %s51, %s52
      %p61 = scmp.eq.s32.totalorder %s20, 0
      %p62 = por %p60, %p61
      %p63 = scmp.ne.s32.totalorder %s51, %s52
      %p64 = scmp.eq.s32.totalorder %s21, 1
      %p65 = por %p63, %p64
      %p67 = scmp.ne.s32.totalorder %s52, %s66
      %p68 = scmp.eq.s32.totalorder %s21, 0
      %p69 = por %p67, %p68
      %s71 = sadd.s32 %s70, 1
      %p74 = scmp.eq.s32.totalorder %s15, 1
      %p75 = scmp.ne.s32.totalorder %s70, %s72
      %p76 = scmp.eq.s32.totalorder %s15, 0
      %p77 = por %p75, %p76
      %p78 = scmp.ne.s32.totalorder %s70, %s72
      %p79 = scmp.eq.s32.totalorder %s20, 1
      %p80 = por %p78, %p79
      %p81 = scmp.ne.s32.totalorder %s72, %s73
      %p82 = scmp.eq.s32.totalorder %s20, 0
      %p83 = por %p81, %p82
      %p84 = scmp.ne.s32.totalorder %s72, %s73
      %p85 = scmp.eq.s32.totalorder %s21, 1
      %p86 = por %p84, %p85
      %p88 = scmp.ne.s32.totalorder %s73, %s87
      %p89 = scmp.eq.s32.totalorder %s21, 0
      %p90 = por %p88, %p89
      %s92 = sadd.s32 %s91, 1
      %p95 = scmp.eq.s32.totalorder %s15, 1
      %p96 = scmp.ne.s32.totalorder %s91, %s93
      %p97 = scmp.eq.s32.totalorder %s15, 0
      %p98 = por %p96, %p97
      %p99 = scmp.ne.s32.totalorder %s91, %s93
      %p100 = scmp.eq.s32.totalorder %s20, 1
      %p101 = por %p99, %p100
      %p102 = scmp.ne.s32.totalorder %s93, %s94
      %p103 = scmp.eq.s32.totalorder %s20, 0
      %p104 = por %p102, %p103
      %p105 = scmp.ne.s32.totalorder %s93, %s94
      %p106 = scmp.eq.s32.totalorder %s21, 1
      %p107 = por %p105, %p106
      %p109 = scmp.ne.s32.totalorder %s94, %s108
      %p110 = scmp.eq.s32.totalorder %s21, 0
      %p111 = por %p109, %p110
      %s113 = sadd.s32 %s112, 1
      %p116 = scmp.eq.s32.totalorder %s15, 1
      %p117 = scmp.ne.s32.totalorder %s112, %s114
      %p118 = scmp.eq.s32.totalorder %s15, 0
      %p119 = por %p117, %p118
      %p120 = scmp.ne.s32.totalorder %s112, %s114
      %p121 = scmp.eq.s32.totalorder %s20, 1
      %p122 = por %p120, %p121
      %p123 = scmp.ne.s32.totalorder %s114, %s115
      %p124 = scmp.eq.s32.totalorder %s20, 0
      %p125 = por %p123, %p124
      %p126 = scmp.ne.s32.totalorder %s114, %s115
      %p127 = scmp.eq.s32.totalorder %s21, 1
      %p128 = por %p126, %p127
      %p130 = scmp.ne.s32.totalorder %s115, %s129
      %p131 = scmp.eq.s32.totalorder %s21, 0
      %p132 = por %p130, %p131
      %s134 = sadd.s32 %s133, 1
      %p137 = scmp.eq.s32.totalorder %s15, 1
      %p138 = scmp.ne.s32.totalorder %s133, %s135
      %p139 = scmp.eq.s32.totalorder %s15, 0
      %p140 = por %p138, %p139
      %p141 = scmp.ne.s32.totalorder %s133, %s135
      %p142 = scmp.eq.s32.totalorder %s20, 1
      %p143 = por %p141, %p142
      %p144 = scmp.ne.s32.totalorder %s135, %s136
      %p145 = scmp.eq.s32.totalorder %s20, 0
      %p146 = por %p144, %p145
      %p147 = scmp.ne.s32.totalorder %s135, %s136
      %p148 = scmp.eq.s32.totalorder %s21, 1
      %p149 = por %p147, %p148
      %p151 = scmp.ne.s32.totalorder %s136, %s150
      %p152 = scmp.eq.s32.totalorder %s21, 0
      %p153 = por %p151, %p152
      %s155 = sadd.s32 %s154, 1
      %p158 = scmp.eq.s32.totalorder %s15, 1
      %p159 = scmp.ne.s32.totalorder %s154, %s156
      %p160 = scmp.eq.s32.totalorder %s15, 0
      %p161 = por %p159, %p160
      %p162 = scmp.ne.s32.totalorder %s154, %s156
      %p163 = scmp.eq.s32.totalorder %s20, 1
      %p164 = por %p162, %p163
      %p165 = scmp.ne.s32.totalorder %s156, %s157
      %p166 = scmp.eq.s32.totalorder %s20, 0
      %p167 = por %p165, %p166
      %p168 = scmp.ne.s32.totalorder %s156, %s157
      %p169 = scmp.eq.s32.totalorder %s21, 1
      %p170 = por %p168, %p169
      %p172 = scmp.ne.s32.totalorder %s157, %s171
      %p173 = scmp.eq.s32.totalorder %s21, 0
      %p174 = por %p172, %p173
      %s175 = ssub.s32 %s15, %s22
      %p176 = scmp.eq.s32.totalorder %s175, 0
      %s178 = sadd.s32 %s177, 1
      %s179 = scalar_select %p176, %s177, %s178
      %p182 = pneg %p176
      %p183 = scmp.eq.s32.totalorder %s15, 1
      %p184 = por %p182, %p183
      %p185 = scmp.ne.s32.totalorder %s177, %s180
      %p186 = scmp.eq.s32.totalorder %s15, 0
      %p187 = por %p185, %p186
      %p188 = scmp.ne.s32.totalorder %s177, %s180
      %p189 = scmp.eq.s32.totalorder %s20, 1
      %p190 = por %p188, %p189
      %p191 = scmp.ne.s32.totalorder %s180, %s181
      %p192 = scmp.eq.s32.totalorder %s20, 0
      %p193 = por %p191, %p192
      %p194 = scmp.ne.s32.totalorder %s180, %s181
      %p195 = scmp.eq.s32.totalorder %s21, 1
      %p196 = por %p194, %p195
      %p198 = scmp.ne.s32.totalorder %s181, %s197
      %p199 = scmp.eq.s32.totalorder %s21, 0
      %p200 = por %p198, %p199
      %p201 = scmp.le.s32.totalorder 1, %s15
      %p202 = scmp.lt.s32.totalorder %s15, 3
      %p203 = pnand %p201, %p202
      %p204 = pneg %p203
      // Predicated region
      $region9: #{_ode_forward_jit.1} parent=5 // pred_check
        _
      $region10: #{_ode_forward_jit.1} parent=5 // pred_check_branch
        %206 = sbr.rel (%p203) target = $region12
      $region11: #{_ode_forward_jit.1} parent=5 // pred_region
        %s207 = ssub.s32 %s15, 1
        // Predicated region
        $region13: #{_ode_forward_jit.1} parent=11 // pred_check
          %p208 = pneg %p62
        $region14: #{_ode_forward_jit.1} parent=11 // pred_check_branch
          %210 = sbr.rel (%p208) target = $region16
        $region15: #{_ode_forward_jit.1} parent=11 // pred_region
          %212 = vsyncadd [#allocation3], 0
          %s213 = sshll.u32 %s1, 4
          %s214 = int_to_ptr.hbm [resolvable:$true] %s213
          %s215 = sshll.u32 [#allocation2], 4
          %s216 = int_to_ptr.vmem [resolvable:$true] %s215
          %221 = dma.hbm_to_vmem [thread:$0]  %s214, 2048, %s216, [#allocation3], 128, 128, 8
        $region16: #{_ode_forward_jit.1} parent=11 // pred_fallthru
          _
        // Predicated region
        $region17: #{_ode_forward_jit.1} parent=11 // pred_check
          %p222 = pneg %p83
        $region18: #{_ode_forward_jit.1} parent=11 // pred_check_branch
          %224 = sbr.rel (%p222) target = $region20
        $region19: #{_ode_forward_jit.1} parent=11 // pred_region
          _
        $region20: #{_ode_forward_jit.1} parent=11 // pred_fallthru
          _
        // Predicated region
        $region21: #{_ode_forward_jit.1} parent=11 // pred_check
          %p225 = pneg %p104
        $region22: #{_ode_forward_jit.1} parent=11 // pred_check_branch
          %227 = sbr.rel (%p225) target = $region24
        $region23: #{_ode_forward_jit.1} parent=11 // pred_region
          %229 = vsyncadd [#allocation5], 0
          %s230 = sshll.u32 %s3, 4
          %s231 = int_to_ptr.hbm [resolvable:$true] %s230
          %s232 = sshll.u32 [#allocation4], 4
          %s233 = int_to_ptr.vmem [resolvable:$true] %s232
          %238 = dma.hbm_to_vmem [thread:$0]  %s231, 2048, %s233, [#allocation5], 128, 128, 8
        $region24: #{_ode_forward_jit.1} parent=11 // pred_fallthru
          _
        // Predicated region
        $region25: #{_ode_forward_jit.1} parent=11 // pred_check
          %p239 = pneg %p125
        $region26: #{_ode_forward_jit.1} parent=11 // pred_check_branch
          %241 = sbr.rel (%p239) target = $region28
        $region27: #{_ode_forward_jit.1} parent=11 // pred_region
          _
        $region28: #{_ode_forward_jit.1} parent=11 // pred_fallthru
          _
        // Predicated region
        $region29: #{_ode_forward_jit.1} parent=11 // pred_check
          %p242 = pneg %p146
        $region30: #{_ode_forward_jit.1} parent=11 // pred_check_branch
          %244 = sbr.rel (%p242) target = $region32
        $region31: #{_ode_forward_jit.1} parent=11 // pred_region
          %246 = vsyncadd [#allocation5], 0
          %s247 = sshll.u32 %s5, 4
          %s248 = int_to_ptr.hbm [resolvable:$true] %s247
          %s249 = sshll.u32 [#allocation6], 4
          %s250 = int_to_ptr.vmem [resolvable:$true] %s249
          %255 = dma.hbm_to_vmem [thread:$0]  %s248, 2048, %s250, [#allocation5], 128, 128, 8
        $region32: #{_ode_forward_jit.1} parent=11 // pred_fallthru
          _
        // Predicated region
        $region33: #{_ode_forward_jit.1} parent=11 // pred_check
          %p256 = pneg %p167
        $region34: #{_ode_forward_jit.1} parent=11 // pred_check_branch
          %258 = sbr.rel (%p256) target = $region36
        $region35: #{_ode_forward_jit.1} parent=11 // pred_region
          _
        $region36: #{_ode_forward_jit.1} parent=11 // pred_fallthru
          _
      $region12: #{_ode_forward_jit.1} parent=5 // pred_fallthru
        _
      %p259 = scmp.lt.s32.totalorder %s15, 2
      // Predicated region
      $region37: #{_ode_forward_jit.1} parent=5 // pred_check
        %p260 = pneg %p259
      $region38: #{_ode_forward_jit.1} parent=5 // pred_check_branch
        %262 = sbr.rel (%p260) target = $region40
      $region39: #{_ode_forward_jit.1} parent=5 // pred_region
        // Predicated region
        $region41: #{_ode_forward_jit.1} parent=39 // pred_check
          %p263 = pneg %p35
        $region42: #{_ode_forward_jit.1} parent=39 // pred_check_branch
          %265 = sbr.rel (%p263) target = $region44
        $region43: #{_ode_forward_jit.1} parent=39 // pred_region
          %p266 = scmp.lt.s32.totalorder %s15, 1
          %s267 = scalar_select %p266, %s15, 1
          %s268 = smul.addr %s267, 8
          %s269 = scalar_lea.vmem %s0, %s268
        $region44: #{_ode_forward_jit.1} parent=39 // pred_fallthru
          _
      $region40: #{_ode_forward_jit.1} parent=5 // pred_fallthru
        _
      %p270 = scmp.le.s32.totalorder 1, %s15
      %p271 = scmp.lt.s32.totalorder %s15, 3
      %p272 = pnand %p270, %p271
      %p273 = pneg %p272
      // Predicated region
      $region45: #{_ode_forward_jit.1} parent=5 // pred_check
        _
      $region46: #{_ode_forward_jit.1} parent=5 // pred_check_branch
        %275 = sbr.rel (%p272) target = $region48
      $region47: #{_ode_forward_jit.1} parent=5 // pred_region
        %s276 = ssub.s32 %s15, 1
        // Predicated region
        $region49: #{_ode_forward_jit.1} parent=47 // pred_check
          %p277 = pneg %p62
        $region50: #{_ode_forward_jit.1} parent=47 // pred_check_branch
          %279 = sbr.rel (%p277) target = $region52
        $region51: #{_ode_forward_jit.1} parent=47 // pred_region
          %281 = dma.done [#allocation3], 2048
        $region52: #{_ode_forward_jit.1} parent=47 // pred_fallthru
          _
        // Predicated region
        $region53: #{_ode_forward_jit.1} parent=47 // pred_check
          %p282 = pneg %p104
        $region54: #{_ode_forward_jit.1} parent=47 // pred_check_branch
          %284 = sbr.rel (%p282) target = $region56
        $region55: #{_ode_forward_jit.1} parent=47 // pred_region
          %286 = dma.done [#allocation5], 2048
        $region56: #{_ode_forward_jit.1} parent=47 // pred_fallthru
          _
        // Predicated region
        $region57: #{_ode_forward_jit.1} parent=47 // pred_check
          %p287 = pneg %p146
        $region58: #{_ode_forward_jit.1} parent=47 // pred_check_branch
          %289 = sbr.rel (%p287) target = $region60
        $region59: #{_ode_forward_jit.1} parent=47 // pred_region
          %291 = dma.done [#allocation5], 2048
        $region60: #{_ode_forward_jit.1} parent=47 // pred_fallthru
          _
        %p292 = scmp.lt.s32.totalorder %s20, 1
        %s293 = scalar_select %p292, %s20, 1
        %s294 = smul.addr %s293, 8
        %s295 = scalar_lea.vmem %s0, %s294
        %p296 = pneg %p41
        %p297 = pneg %p38
        %p298 = pneg %p62
        %p299 = pneg %p59
        %p300 = pneg %p83
        %p301 = pneg %p80
        %p302 = pneg %p104
        %p303 = pneg %p101
        %p304 = pneg %p125
        %p305 = pneg %p122
        %p306 = pneg %p146
        %p307 = pneg %p143
        %p308 = pneg %p167
        %p309 = pneg %p164
        %p310 = pneg %p193
        %p311 = pneg %p190
        %p312 = scmp.lt.s32.totalorder %s20, 1
        %s313 = scalar_select %p312, %s20, 1
        %s314 = smul.addr %s313, 8
        %s315 = scalar_lea.vmem %s7, %s314
        %p316 = scmp.lt.s32.totalorder %s20, 1
        %s317 = scalar_select %p316, %s20, 1
        %s318 = smul.addr %s317, 8
        %s319 = scalar_lea.vmem %s0, %s318
        %p320 = scmp.lt.s32.totalorder %s20, 1
        %s321 = scalar_select %p320, %s20, 1
        %s322 = smul.addr %s321, 8
        %s323 = scalar_lea.vmem %s7, %s322
        %v324 = vld [vmem:[#allocation2] sm:$0xff]
        %v325 = vld [vmem:[#allocation2 + $0x8] sm:$0xff]
        %v326 = vld [vmem:[#allocation2 + $0x10] sm:$0xff]
        %v327 = vld [vmem:[#allocation2 + $0x18] sm:$0xff]
        %v328 = vld [vmem:[#allocation2 + $0x20] sm:$0xff]
        %v329 = vld [vmem:[#allocation2 + $0x28] sm:$0xff]
        %v330 = vld [vmem:[#allocation2 + $0x30] sm:$0xff]
        %v331 = vld [vmem:[#allocation2 + $0x38] sm:$0xff]
        %v332 = vld [vmem:[#allocation2 + $0x40] sm:$0xff]
        %v333 = vld [vmem:[#allocation2 + $0x48] sm:$0xff]
        %v334 = vld [vmem:[#allocation2 + $0x50] sm:$0xff]
        %v335 = vld [vmem:[#allocation2 + $0x58] sm:$0xff]
        %v336 = vld [vmem:[#allocation2 + $0x60] sm:$0xff]
        %v337 = vld [vmem:[#allocation2 + $0x68] sm:$0xff]
        %v338 = vld [vmem:[#allocation2 + $0x70] sm:$0xff]
        %v339 = vld [vmem:[#allocation2 + $0x78] sm:$0xff]
        %v340 = vld [vmem:[#allocation4] sm:$0xff]
        %v341 = vld [vmem:[#allocation4 + $0x8] sm:$0xff]
        %v342 = vld [vmem:[#allocation4 + $0x10] sm:$0xff]
        %v343 = vld [vmem:[#allocation4 + $0x18] sm:$0xff]
        %v344 = vld [vmem:[#allocation4 + $0x20] sm:$0xff]
        %v345 = vld [vmem:[#allocation4 + $0x28] sm:$0xff]
        %v346 = vld [vmem:[#allocation4 + $0x30] sm:$0xff]
        %v347 = vld [vmem:[#allocation4 + $0x38] sm:$0xff]
        %v348 = vld [vmem:[#allocation4 + $0x40] sm:$0xff]
        %v349 = vld [vmem:[#allocation4 + $0x48] sm:$0xff]
        %v350 = vld [vmem:[#allocation4 + $0x50] sm:$0xff]
        %v351 = vld [vmem:[#allocation4 + $0x58] sm:$0xff]
        %v352 = vld [vmem:[#allocation4 + $0x60] sm:$0xff]
        %v353 = vld [vmem:[#allocation4 + $0x68] sm:$0xff]
        %v354 = vld [vmem:[#allocation4 + $0x70] sm:$0xff]
        %v355 = vld [vmem:[#allocation4 + $0x78] sm:$0xff]
        %v356 = vld [vmem:[#allocation6] sm:$0xff]
        %v357 = vld [vmem:[#allocation6 + $0x8] sm:$0xff]
        %v358 = vld [vmem:[#allocation6 + $0x10] sm:$0xff]
        %v359 = vld [vmem:[#allocation6 + $0x18] sm:$0xff]
        %v360 = vld [vmem:[#allocation6 + $0x20] sm:$0xff]
        %v361 = vld [vmem:[#allocation6 + $0x28] sm:$0xff]
        %v362 = vld [vmem:[#allocation6 + $0x30] sm:$0xff]
        %v363 = vld [vmem:[#allocation6 + $0x38] sm:$0xff]
        %v364 = vld [vmem:[#allocation6 + $0x40] sm:$0xff]
        %v365 = vld [vmem:[#allocation6 + $0x48] sm:$0xff]
        %v366 = vld [vmem:[#allocation6 + $0x50] sm:$0xff]
        %v367 = vld [vmem:[#allocation6 + $0x58] sm:$0xff]
        %v368 = vld [vmem:[#allocation6 + $0x60] sm:$0xff]
        %v369 = vld [vmem:[#allocation6 + $0x68] sm:$0xff]
        %v370 = vld [vmem:[#allocation6 + $0x70] sm:$0xff]
        %v371 = vld [vmem:[#allocation6 + $0x78] sm:$0xff]
        %v372 = vld [vmem:[%s2] sm:$0x1]
        %v373 = vld [vmem:[%s4] sm:$0x1]
        %v374 = vld [vmem:[%s6] sm:$0x1]
        %v375 = vld [vmem:[%s319] sm:$0xff]
        %v377 = vperm.slane %v372, 0
        %379 = vmatpush.msra.mxu0 %v339
        %380 = vmatpush.msra.mxu0 %v338
        %381 = vmatpush.msra.mxu0 %v337
        %382 = vmatpush.msra.mxu0 %v336
        %383 = vmatpush.msra.mxu0 %v335
        %384 = vmatpush.msra.mxu0 %v334
        %385 = vmatpush.msra.mxu0 %v333
        %386 = vmatpush.msra.mxu0 %v332
        %387 = vmatpush.msra.mxu0 %v331
        %388 = vmatpush.msra.mxu0 %v330
        %389 = vmatpush.msra.mxu0 %v329
        %390 = vmatpush.msra.mxu0 %v328
        %391 = vmatpush.msra.mxu0 %v327
        %392 = vmatpush.msra.mxu0 %v326
        %393 = vmatpush.msra.mxu0 %v325
        %394 = vmatpush.msra.mxu0 %v324
        %395 = vmatmul.f32.gmra.mxu0 %v375
        %v396 = vpop.f32.mrf.mxu0
        %v397 = vadd.f32 %v377, %v396
        %398 = vdwg.mxu0
        %v399 = vxor.u32 %v397, 2147483648
        %v400 = vmul.f32 %v399, 1.442695
        %v401 = vpow.pop %v400
        %v402 = vadd.f32 %v401, 1.0
        %v403 = vrcp.pop %v402
        %v404 = vmul.f32 %v402, %v403
        %v405 = vsub.f32 1.0, %v404
        %v406 = vmul.f32 %v403, %v405
        %v407 = vadd.f32 %v403, %v406
        %vm408 = vweird.f32 %v402
        %vm409 = vweird.f32 %v403
        %vm410 = vmor %vm408, %vm409
        %v411 = vsel %vm410, %v403, %v407
        %v412 = vand.u32 2147483647, %v402
        %vm413 = vcmp.eq.f32.partialorder %v412, 8.507059e+37
        %v414 = vand.u32 %v402, 2147483648
        %v415 = vor.u32 1.1754944e-38, %v414
        %v416 = vsel %vm413, %v415, %v411
        %v417 = vmul.f32 1.0, %v416
        %v418 = vmul.f32 %v397, %v417
        %v420 = vperm.slane %v373, 0
        %422 = vmatpush.msra.mxu0 %v355
        %423 = vmatpush.msra.mxu0 %v354
        %424 = vmatpush.msra.mxu0 %v353
        %425 = vmatpush.msra.mxu0 %v352
        %426 = vmatpush.msra.mxu0 %v351
        %427 = vmatpush.msra.mxu0 %v350
        %428 = vmatpush.msra.mxu0 %v349
        %429 = vmatpush.msra.mxu0 %v348
        %430 = vmatpush.msra.mxu0 %v347
        %431 = vmatpush.msra.mxu0 %v346
        %432 = vmatpush.msra.mxu0 %v345
        %433 = vmatpush.msra.mxu0 %v344
        %434 = vmatpush.msra.mxu0 %v343
        %435 = vmatpush.msra.mxu0 %v342
        %436 = vmatpush.msra.mxu0 %v341
        %437 = vmatpush.msra.mxu0 %v340
        %438 = vmatmul.f32.gmra.mxu0 %v418
        %v439 = vpop.f32.mrf.mxu0
        %v440 = vadd.f32 %v420, %v439
        %441 = vdwg.mxu0
        %v442 = vxor.u32 %v440, 2147483648
        %v443 = vmul.f32 %v442, 1.442695
        %v444 = vpow.pop %v443
        %v445 = vadd.f32 %v444, 1.0
        %v446 = vrcp.pop %v445
        %v447 = vmul.f32 %v445, %v446
        %v448 = vsub.f32 1.0, %v447
        %v449 = vmul.f32 %v446, %v448
        %v450 = vadd.f32 %v446, %v449
        %vm451 = vweird.f32 %v445
        %vm452 = vweird.f32 %v446
        %vm453 = vmor %vm451, %vm452
        %v454 = vsel %vm453, %v446, %v450
        %v455 = vand.u32 2147483647, %v445
        %vm456 = vcmp.eq.f32.partialorder %v455, 8.507059e+37
        %v457 = vand.u32 %v445, 2147483648
        %v458 = vor.u32 1.1754944e-38, %v457
        %v459 = vsel %vm456, %v458, %v454
        %v460 = vmul.f32 1.0, %v459
        %v461 = vmul.f32 %v440, %v460
        %v463 = vperm.slane %v374, 0
        %465 = vmatpush.msra.mxu0 %v371
        %466 = vmatpush.msra.mxu0 %v370
        %467 = vmatpush.msra.mxu0 %v369
        %468 = vmatpush.msra.mxu0 %v368
        %469 = vmatpush.msra.mxu0 %v367
        %470 = vmatpush.msra.mxu0 %v366
        %471 = vmatpush.msra.mxu0 %v365
        %472 = vmatpush.msra.mxu0 %v364
        %473 = vmatpush.msra.mxu0 %v363
        %474 = vmatpush.msra.mxu0 %v362
        %475 = vmatpush.msra.mxu0 %v361
        %476 = vmatpush.msra.mxu0 %v360
        %477 = vmatpush.msra.mxu0 %v359
        %478 = vmatpush.msra.mxu0 %v358
        %479 = vmatpush.msra.mxu0 %v357
        %480 = vmatpush.msra.mxu0 %v356
        %481 = vmatmul.f32.gmra.mxu0 %v461
        %v482 = vpop.f32.mrf.mxu0
        %v483 = vadd.f32 %v463, %v482
        %484 = vdwg.mxu0
        %v485 = vtanh.pop %v483
        %v486 = vadd.f32 %v375, %v485
        %487 = vst [vmem:[%s323] sm:$0xff] %v486
        %p488 = scmp.lt.s32.totalorder %s20, 1
        %s489 = scalar_select %p488, %s20, 1
        %s490 = smul.addr %s489, 8
        %s491 = scalar_lea.vmem %s7, %s490
        // Predicated region
        $region61: #{_ode_forward_jit.1} parent=47 // pred_check
          %p492 = pneg %p190
        $region62: #{_ode_forward_jit.1} parent=47 // pred_check_branch
          %494 = sbr.rel (%p492) target = $region64
        $region63: #{_ode_forward_jit.1} parent=47 // pred_region
          _
        $region64: #{_ode_forward_jit.1} parent=47 // pred_fallthru
          _
      $region48: #{_ode_forward_jit.1} parent=5 // pred_fallthru
        _
      %p495 = scmp.le.s32.totalorder 2, %s15
      // Predicated region
      $region65: #{_ode_forward_jit.1} parent=5 // pred_check
        %p496 = pneg %p495
      $region66: #{_ode_forward_jit.1} parent=5 // pred_check_branch
        %498 = sbr.rel (%p496) target = $region68
      $region67: #{_ode_forward_jit.1} parent=5 // pred_region
        %s499 = ssub.s32 %s15, 2
        // Predicated region
        $region69: #{_ode_forward_jit.1} parent=67 // pred_check
          %p500 = pneg %p196
        $region70: #{_ode_forward_jit.1} parent=67 // pred_check_branch
          %502 = sbr.rel (%p500) target = $region72
        $region71: #{_ode_forward_jit.1} parent=67 // pred_region
          %p503 = scmp.lt.s32.totalorder %s21, 1
          %s504 = scalar_select %p503, %s21, 1
          %s505 = smul.addr %s504, 8
          %s506 = scalar_lea.vmem %s7, %s505
        $region72: #{_ode_forward_jit.1} parent=67 // pred_fallthru
          _
      $region68: #{_ode_forward_jit.1} parent=5 // pred_fallthru
        _
    $region6: #{_ode_forward_jit.1} parent=1 // loop_footer
      %s19 = sadd.s32 1, %s15
    $region7: #{_ode_forward_jit.1} parent=1 // loop_footer_branch
      %14 = sbr.rel target = $region3
    $region8: #{_ode_forward_jit.1} parent=1 // loop_exit
      _
    %507 = vsyncpa [#allocation3], 1
    %s508 = scalar_lea.sflag [#allocation3], 1
    %509 = vsyncpa %s508, 1
    %510 = vsyncpa [#allocation5], 1

</llo_original>
